<compile_context>
chip_gen: v7x
topology: tpu7x:2x2x1
jax: 0.10.0
libtpu: 0.0.40
codegen_flags: <defaults>
</compile_context>

<pallas_src>
import functools

import jax
import jax.numpy as jnp
from jax.experimental import pallas as pl
from jax.experimental.pallas import tpu as pltpu


def _ce_kernel(logits_ref, targets_ref, loss_ref, m_sc, l_sc, t_sc, *,
               c_total, tc, lw, needs_mask):
    """One (TN, TC) logits tile; per-lane online-logsumexp + target pick."""
    k = pl.program_id(1)                       # class-chunk index (reduction)
    neg_big = jnp.float32(-1e30)               # finite "-inf" (NaN-safe rescale)

    @pl.when(k == 0)
    def _():
        m_sc[...] = jnp.full_like(m_sc, neg_big)
        l_sc[...] = jnp.zeros_like(l_sc)
        t_sc[...] = jnp.zeros_like(t_sc)

    targets = targets_ref[...]                 # (TN, 1) int32
    base = k * tc                              # global class offset of chunk
    tn = logits_ref.shape[0]
    lane = jax.lax.broadcasted_iota(jnp.int32, (tn, lw), 1)
    g_count = tc // lw                         # 128-wide lane groups per chunk

    def group(g):
        x = logits_ref[:, g * lw:(g + 1) * lw].astype(jnp.float32)
        if needs_mask:
            # columns >= C (ragged tail chunk) contribute nothing.
            x = jnp.where(lane < (c_total - base - g * lw), x, neg_big)
        return x

    # ---- pass 1: per-lane max over this chunk (elementwise, no XLU) -------
    gmax = group(0)
    for g in range(1, g_count):
        gmax = jnp.maximum(gmax, group(g))
    m_prev = m_sc[...]
    m_new = jnp.maximum(m_prev, gmax)

    # ---- pass 2: per-lane exp-sum + masked target-logit pick --------------
    psum = jnp.zeros_like(m_new)
    tsum = jnp.zeros_like(m_new)
    for g in range(g_count):
        x = group(g)
        psum = psum + jnp.exp(x - m_new)
        # global col == target  <=>  lane == target - base - g*lw
        tsum = tsum + jnp.where(lane == (targets - (base + g * lw)), x, 0.0)

    l_sc[...] = l_sc[...] * jnp.exp(m_prev - m_new) + psum
    t_sc[...] = t_sc[...] + tsum
    m_sc[...] = m_new

    # ---- finalize: single cross-lane reduction + log, last chunk only -----
    @pl.when(k == pl.num_programs(1) - 1)
    def _():
        m_lane = m_sc[...]
        m_row = jnp.max(m_lane, axis=-1, keepdims=True)              # (TN,1)
        l_row = jnp.sum(l_sc[...] * jnp.exp(m_lane - m_row),
                        axis=-1, keepdims=True)
        t_row = jnp.sum(t_sc[...], axis=-1, keepdims=True)
        loss_ref[...] = m_row + jnp.log(l_row) - t_row


def _round_up(x, m):
    return (x + m - 1) // m * m


@functools.partial(jax.jit, static_argnames=("tn", "tc"))
def cross_entropy_loss(y_pred, y_true, *, tn=256, tc=4096):
    """PyTorch nn.CrossEntropyLoss (mean reduction) forward.

    y_pred: (N, C) float logits. Pass bf16 to halve HBM traffic -- the kernel
            casts to f32 in-register and accumulates in f32.
    y_true: (N,) integer class indices.
    Returns a scalar float32 loss.
    """
    n, c = y_pred.shape

    # --- N tiling: multiple of 8 (or == N). Force >=2 N blocks when possible
    #     so the "parallel" axis can be sharded across v7x's 2 TensorCores.
    if n <= 16:
        tn_ = n
    elif n <= tn:
        tn_ = _round_up((n + 1) // 2, 8)
    else:
        tn_ = tn

    # --- C tiling: multiple of 128 (or == C when C <= 128). Ragged tails are
    #     masked in-kernel -- no jnp.pad, no extra HBM round trip of logits.
    if c <= 128:
        tc_ = c
    else:
        tc_ = min(tc, (c // 128) * 128)
    lw = min(128, tc_)                       # lane-accumulator width
    needs_mask = (c % tc_) != 0

    grid = (pl.cdiv(n, tn_), pl.cdiv(c, tc_))
    targets = y_true.astype(jnp.int32).reshape(n, 1)
    dsize = jnp.dtype(y_pred.dtype).itemsize

    # VMEM budget: double-buffered logits tile + f32 temporaries + lane scratch.
    vmem_bytes = (2 * tn_ * tc_ * dsize      # pipelined logits tiles
                  + 2 * tn_ * tc_ * 4        # f32 in-register/temp upper bound
                  + 3 * tn_ * lw * 4         # per-lane accumulators
                  + 8 * tn_ * 8)             # targets/output blocks
    vmem_limit = int(min(max(2 * vmem_bytes, 32 << 20), 48 << 20))

    cost = pl.CostEstimate(
        flops=6 * n * c,
        transcendentals=n * c,               # ~one exp per logit
        bytes_accessed=n * c * dsize + n * 8,
    )

    kernel = functools.partial(
        _ce_kernel, c_total=c, tc=tc_, lw=lw, needs_mask=needs_mask)

    per_sample = pl.pallas_call(
        kernel,
        out_shape=jax.ShapeDtypeStruct((n, 1), jnp.float32),
        grid_spec=pltpu.PrefetchScalarGridSpec(
            num_scalar_prefetch=0,
            grid=grid,
            in_specs=[
                pl.BlockSpec((tn_, tc_), lambda i, k: (i, k)),
                pl.BlockSpec((tn_, 1), lambda i, k: (i, 0)),
            ],
            out_specs=pl.BlockSpec((tn_, 1), lambda i, k: (i, 0)),
            scratch_shapes=[
                pltpu.VMEM((tn_, lw), jnp.float32),   # per-lane running max
                pltpu.VMEM((tn_, lw), jnp.float32),   # per-lane exp-sum
                pltpu.VMEM((tn_, lw), jnp.float32),   # per-lane target logit
            ],
        ),
        compiler_params=pltpu.CompilerParams(
            dimension_semantics=("parallel", "arbitrary"),
            vmem_limit_bytes=vmem_limit,
        ),
        cost_estimate=cost,
    )(y_pred, targets)

    # Final mean reduction over rows, in plain JAX.
    return jnp.sum(per_sample[:, 0]) / n


if __name__ == "__main__":
    key = jax.random.PRNGKey(0)

    def _ref(y_pred, y_true):
        lp = y_pred.astype(jnp.float32)
        return jnp.mean(
            jax.nn.logsumexp(lp, axis=-1)
            - jnp.take_along_axis(
                lp, y_true[:, None].astype(jnp.int32), axis=-1)[:, 0])

    # Case 1: tiny single-block path (module-scale shapes).
    k1, k2 = jax.random.split(key)
    N, C = 8, 32
    y_pred = jax.random.normal(k1, (N, C), dtype=jnp.float32)
    y_true = jax.random.randint(k2, (N,), 0, C, dtype=jnp.int32)
    loss = cross_entropy_loss(y_pred, y_true)
    jax.block_until_ready(loss)
    assert jnp.allclose(loss, _ref(y_pred, y_true), atol=1e-5, rtol=1e-5), (
        loss, _ref(y_pred, y_true))

    # Case 2: default tiling with ragged N tail (dropped rows) and ragged C
    # tail (in-kernel column masking), 2 N blocks for megacore.
    k3, k4 = jax.random.split(k1)
    N2, C2 = 20, 300
    y_pred2 = jax.random.normal(k3, (N2, C2), dtype=jnp.float32)
    y_true2 = jax.random.randint(k4, (N2,), 0, C2, dtype=jnp.int32)
    loss2 = cross_entropy_loss(y_pred2, y_true2)
    jax.block_until_ready(loss2)
    assert jnp.allclose(loss2, _ref(y_pred2, y_true2), atol=1e-5, rtol=1e-5), (
        loss2, _ref(y_pred2, y_true2))

    # Case 3: explicit small tiles -> multi-chunk streaming path, bf16 logits.
    k5, k6 = jax.random.split(k3)
    N3, C3 = 24, 384
    y_pred3 = jax.random.normal(k5, (N3, C3), dtype=jnp.float32).astype(jnp.bfloat16)
    y_true3 = jax.random.randint(k6, (N3,), 0, C3, dtype=jnp.int32)
    loss3 = cross_entropy_loss(y_pred3, y_true3, tn=8, tc=128)
    jax.block_until_ready(loss3)
    assert jnp.allclose(loss3, _ref(y_pred3, y_true3), atol=1e-3, rtol=1e-3), (
        loss3, _ref(y_pred3, y_true3))

    print("KERNEL_OK")
</pallas_src>

<mosaic_0001>
module attributes {stable_mosaic.version = 11 : i64} {
  func.func @_ce_kernel(%arg0: i32, %arg1: i32, %arg2: memref<8x32xf32, #tpu.memory_space<vmem>>, %arg3: memref<8x1xi32, #tpu.memory_space<vmem>>, %arg4: memref<8x1xf32, #tpu.memory_space<vmem>>, %arg5: memref<8x32xf32, #tpu.memory_space<vmem>>, %arg6: memref<8x32xf32, #tpu.memory_space<vmem>>, %arg7: memref<8x32xf32, #tpu.memory_space<vmem>>) attributes {dimension_semantics = [#tpu.dimension_semantics<parallel>, #tpu.dimension_semantics<arbitrary>], iteration_bounds = array<i64: 1, 1>, scalar_prefetch = 0 : i64, scratch_operands = 3 : i64, tpu.core_type = #tpu.core_type<tc>, window_params = [{transform_indices = @transform_0, window_bounds = array<i64: 8, 32>}, {transform_indices = @transform_1, window_bounds = array<i64: 8, 1>}, {transform_indices = @transform_2, window_bounds = array<i64: 8, 1>}]} {
    %c0_i32 = arith.constant 0 : i32
    %0 = arith.cmpi eq, %arg1, %c0_i32 : i32
    %1 = arith.extui %0 : i1 to i32
    %cst = arith.constant -1.000000e+30 : f32
    %c0_i32_0 = arith.constant 0 : i32
    %2 = arith.cmpi ne, %1, %c0_i32_0 : i32
    scf.if %2 {
      %36 = vector.broadcast %cst : f32 to vector<8x32xf32>
      %c0_24 = arith.constant 0 : index
      %c0_25 = arith.constant 0 : index
      %37 = vector.load %arg5[%c0_24, %c0_25] : memref<8x32xf32, #tpu.memory_space<vmem>>, vector<8x32xf32>
      tpu.vector_store %arg5[%c0_24, %c0_25], %36 {strides = array<i32>} : memref<8x32xf32, #tpu.memory_space<vmem>>, vector<8x32xf32>,
      %cst_26 = arith.constant 0.000000e+00 : f32
      %38 = vector.broadcast %cst_26 : f32 to vector<8x32xf32>
      %c0_27 = arith.constant 0 : index
      %c0_28 = arith.constant 0 : index
      %39 = vector.load %arg6[%c0_27, %c0_28] : memref<8x32xf32, #tpu.memory_space<vmem>>, vector<8x32xf32>
      tpu.vector_store %arg6[%c0_27, %c0_28], %38 {strides = array<i32>} : memref<8x32xf32, #tpu.memory_space<vmem>>, vector<8x32xf32>,
      %cst_29 = arith.constant 0.000000e+00 : f32
      %40 = vector.broadcast %cst_29 : f32 to vector<8x32xf32>
      %c0_30 = arith.constant 0 : index
      %c0_31 = arith.constant 0 : index
      %41 = vector.load %arg7[%c0_30, %c0_31] : memref<8x32xf32, #tpu.memory_space<vmem>>, vector<8x32xf32>
      tpu.vector_store %arg7[%c0_30, %c0_31], %40 {strides = array<i32>} : memref<8x32xf32, #tpu.memory_space<vmem>>, vector<8x32xf32>,
    } else {
    }
    %c0 = arith.constant 0 : index
    %c0_1 = arith.constant 0 : index
    %3 = vector.load %arg3[%c0, %c0_1] : memref<8x1xi32, #tpu.memory_space<vmem>>, vector<8x1xi32>
    %c32_i32 = arith.constant 32 : i32
    %4 = arith.muli %arg1, %c32_i32 : i32
    %5 = tpu.iota {dimensions = array<i32: 1>} : vector<8x32xi32>
    %c0_2 = arith.constant 0 : index
    %c0_3 = arith.constant 0 : index
    %6 = vector.load %arg2[%c0_2, %c0_3] : memref<8x32xf32, #tpu.memory_space<vmem>>, vector<8x32xf32>
    %c0_4 = arith.constant 0 : index
    %c0_5 = arith.constant 0 : index
    %7 = vector.load %arg5[%c0_4, %c0_5] : memref<8x32xf32, #tpu.memory_space<vmem>>, vector<8x32xf32>
    %8 = arith.maximumf %7, %6 : vector<8x32xf32>
    %cst_6 = arith.constant 0.000000e+00 : f32
    %9 = vector.broadcast %cst_6 : f32 to vector<8x32xf32>
    %cst_7 = arith.constant 0.000000e+00 : f32
    %10 = vector.broadcast %cst_7 : f32 to vector<8x32xf32>
    %c0_8 = arith.constant 0 : index
    %c0_9 = arith.constant 0 : index
    %11 = vector.load %arg2[%c0_8, %c0_9] : memref<8x32xf32, #tpu.memory_space<vmem>>, vector<8x32xf32>
    %12 = arith.subf %11, %8 : vector<8x32xf32>
    %13 = math.exp %12 : vector<8x32xf32>
    %14 = arith.addf %9, %13 : vector<8x32xf32>
    %c0_i32_10 = arith.constant 0 : i32
    %15 = arith.addi %4, %c0_i32_10 : i32
    %16 = vector.broadcast %15 : i32 to vector<8x1xi32>
    %17 = arith.subi %3, %16 : vector<8x1xi32>
    %18 = vector.broadcast %17 : vector<8x1xi32> to vector<8x32xi32>
    %19 = arith.cmpi eq, %5, %18 : vector<8x32xi32>
    %cst_11 = arith.constant 0.000000e+00 : f32
    %20 = vector.broadcast %cst_11 : f32 to vector<8x32xf32>
    %21 = arith.select %19, %11, %20 : vector<8x32xi1>, vector<8x32xf32>
    %22 = arith.addf %10, %21 : vector<8x32xf32>
    %c0_12 = arith.constant 0 : index
    %c0_13 = arith.constant 0 : index
    %23 = vector.load %arg6[%c0_12, %c0_13] : memref<8x32xf32, #tpu.memory_space<vmem>>, vector<8x32xf32>
    %24 = arith.subf %7, %8 : vector<8x32xf32>
    %25 = math.exp %24 : vector<8x32xf32>
    %26 = arith.mulf %23, %25 : vector<8x32xf32>
    %27 = arith.addf %26, %14 : vector<8x32xf32>
    %c0_14 = arith.constant 0 : index
    %c0_15 = arith.constant 0 : index
    %28 = vector.load %arg6[%c0_14, %c0_15] : memref<8x32xf32, #tpu.memory_space<vmem>>, vector<8x32xf32>
    tpu.vector_store %arg6[%c0_14, %c0_15], %27 {strides = array<i32>} : memref<8x32xf32, #tpu.memory_space<vmem>>, vector<8x32xf32>,
    %c0_16 = arith.constant 0 : index
    %c0_17 = arith.constant 0 : index
    %29 = vector.load %arg7[%c0_16, %c0_17] : memref<8x32xf32, #tpu.memory_space<vmem>>, vector<8x32xf32>
    %30 = arith.addf %29, %22 : vector<8x32xf32>
    %c0_18 = arith.constant 0 : index
    %c0_19 = arith.constant 0 : index
    %31 = vector.load %arg7[%c0_18, %c0_19] : memref<8x32xf32, #tpu.memory_space<vmem>>, vector<8x32xf32>
    tpu.vector_store %arg7[%c0_18, %c0_19], %30 {strides = array<i32>} : memref<8x32xf32, #tpu.memory_space<vmem>>, vector<8x32xf32>,
    %c0_20 = arith.constant 0 : index
    %c0_21 = arith.constant 0 : index
    %32 = vector.load %arg5[%c0_20, %c0_21] : memref<8x32xf32, #tpu.memory_space<vmem>>, vector<8x32xf32>
    tpu.vector_store %arg5[%c0_20, %c0_21], %8 {strides = array<i32>} : memref<8x32xf32, #tpu.memory_space<vmem>>, vector<8x32xf32>,
    %c0_i32_22 = arith.constant 0 : i32
    %33 = arith.cmpi eq, %arg1, %c0_i32_22 : i32
    %34 = arith.extui %33 : i1 to i32
    %c0_i32_23 = arith.constant 0 : i32
    %35 = arith.cmpi ne, %34, %c0_i32_23 : i32
    scf.if %35 {
      %c0_24 = arith.constant 0 : index
      %c0_25 = arith.constant 0 : index
      %36 = vector.load %arg5[%c0_24, %c0_25] : memref<8x32xf32, #tpu.memory_space<vmem>>, vector<8x32xf32>
      %cst_26 = arith.constant dense<0xFF800000> : vector<8xf32>
      %37 = vector.multi_reduction <maximumf>, %36, %cst_26 [1] : vector<8x32xf32> to vector<8xf32>
      %38 = vector.shape_cast %37 : vector<8xf32> to vector<8x1xf32>
      %c0_27 = arith.constant 0 : index
      %c0_28 = arith.constant 0 : index
      %39 = vector.load %arg6[%c0_27, %c0_28] : memref<8x32xf32, #tpu.memory_space<vmem>>, vector<8x32xf32>
      %40 = vector.broadcast %38 : vector<8x1xf32> to vector<8x32xf32>
      %41 = arith.subf %36, %40 : vector<8x32xf32>
      %42 = math.exp %41 : vector<8x32xf32>
      %43 = arith.mulf %39, %42 : vector<8x32xf32>
      %cst_29 = arith.constant dense<0.000000e+00> : vector<8xf32>
      %44 = vector.multi_reduction <add>, %43, %cst_29 [1] : vector<8x32xf32> to vector<8xf32>
      %45 = vector.shape_cast %44 : vector<8xf32> to vector<8x1xf32>
      %c0_30 = arith.constant 0 : index
      %c0_31 = arith.constant 0 : index
      %46 = vector.load %arg7[%c0_30, %c0_31] : memref<8x32xf32, #tpu.memory_space<vmem>>, vector<8x32xf32>
      %cst_32 = arith.constant dense<0.000000e+00> : vector<8xf32>
      %47 = vector.multi_reduction <add>, %46, %cst_32 [1] : vector<8x32xf32> to vector<8xf32>
      %48 = vector.shape_cast %47 : vector<8xf32> to vector<8x1xf32>
      %49 = math.log %45 : vector<8x1xf32>
      %50 = arith.addf %38, %49 : vector<8x1xf32>
      %51 = arith.subf %50, %48 : vector<8x1xf32>
      %c0_33 = arith.constant 0 : index
      %c0_34 = arith.constant 0 : index
      %52 = vector.load %arg4[%c0_33, %c0_34] : memref<8x1xf32, #tpu.memory_space<vmem>>, vector<8x1xf32>
      tpu.vector_store %arg4[%c0_33, %c0_34], %51 {strides = array<i32>} : memref<8x1xf32, #tpu.memory_space<vmem>>, vector<8x1xf32>,
    } else {
    }
    return
  }
  func.func @transform_0(%arg0: i32, %arg1: i32) -> (i32, i32) {
    %c0_i32 = arith.constant 0 : i32
    return %arg0, %arg1 : i32, i32
  }
  func.func @transform_1(%arg0: i32, %arg1: i32) -> (i32, i32) {
    %c0_i32 = arith.constant 0 : i32
    %c0_i32_0 = arith.constant 0 : i32
    return %arg0, %c0_i32 : i32, i32
  }
  func.func @transform_2(%arg0: i32, %arg1: i32) -> (i32, i32) {
    %c0_i32 = arith.constant 0 : i32
    %c0_i32_0 = arith.constant 0 : i32
    return %arg0, %c0_i32 : i32, i32
  }
}

</mosaic_0001>

<llo_original>
// kernel: cross_entropy_loss.1
$region0: #{cross_entropy_loss.1}
  #allocation0 [shape = 'u32[]', space=smem, size = 0x4, offset = 0x4, fixed_abs, tag = 'smem constant byte address 0x4 - core index']
  #allocation1 [shape = 'u32[144,128]{1,0:T(1,128)}', space=vmem, size = 0x12000, scoped, tag = 'internal scratch']
  #allocation2 [shape = 'f32[8,32]{1,0:T(8,128)}', space=vmem, size = 0x1000, scoped, tag = 'scratch operand']
  #allocation3 [shape = 'f32[8,32]{1,0:T(8,128)}', space=vmem, size = 0x1000, scoped, tag = 'scratch operand']
  #allocation4 [shape = 'f32[8,32]{1,0:T(8,128)}', space=vmem, size = 0x1000, scoped, tag = 'scratch operand']
  %s0 = inlined_call_operand.vmem [shape: f32[8,32], index: 0, kind: input, shape index: {}]
  %s1 = inlined_call_operand.vmem [shape: s32[8,1], index: 1, kind: input, shape index: {}]
  %s2 = inlined_call_operand.vmem [shape: f32[8,1], index: 2, kind: output, shape index: {}]
  %s3 = sld [smem:[#allocation0]]
  $region26: #{cross_entropy_loss.1} parent=0
    _
  %s5 = ssub.s32 1, %s3
  %s6 = scalar_select 0, %s5, %s3
  // Predicated region
  $region2: #{cross_entropy_loss.1} parent=0 // pred_check
    _
  $region3: #{cross_entropy_loss.1} parent=0 // pred_check_branch
    %8 = sbr.rel (0) target = $region5
  $region4: #{cross_entropy_loss.1} parent=0 // pred_region
    _
  $region5: #{cross_entropy_loss.1} parent=0 // pred_fallthru
    _
  // Predicated region
  $region6: #{cross_entropy_loss.1} parent=0 // pred_check
    _
  $region7: #{cross_entropy_loss.1} parent=0 // pred_check_branch
    %10 = sbr.rel (0) target = $region9
  $region8: #{cross_entropy_loss.1} parent=0 // pred_region
    _
  $region9: #{cross_entropy_loss.1} parent=0 // pred_fallthru
    _
  %p11 = scmp.eq.s32.totalorder 0, 0
  // Predicated region
  $region10: #{cross_entropy_loss.1} parent=0 // pred_check
    %p12 = pneg %p11
  $region11: #{cross_entropy_loss.1} parent=0 // pred_check_branch
    %14 = sbr.rel (%p12) target = $region13
  $region12: #{cross_entropy_loss.1} parent=0 // pred_region
    %vm15 = vcmask 261120
    %16 = vst.msk [vmem:[#allocation2] sm:$0xff] %vm15, -1e+30
    %17 = vst.msk [vmem:[#allocation3] sm:$0xff] %vm15, 0.0
    %18 = vst.msk [vmem:[#allocation4] sm:$0xff] %vm15, 0.0
  $region13: #{cross_entropy_loss.1} parent=0 // pred_fallthru
    _
  %v19 = vld [vmem:[%s1] sm:$0xff]
  %s20 = smul.u32 0, 32
  %v21 = vlaneseq
  %v22 = vand.u32 %v21, 127
  %v23 = vld [vmem:[%s0] sm:$0xff]
  %v24 = vld [vmem:[#allocation2] sm:$0xff]
  %v25 = vmax.f32 %v24, %v23
  %v26 = vsub.f32 %v23, %v25
  %v27 = vmul.f32 %v26, 1.442695
  %v28 = vpow.pop %v27
  %v29 = vadd.f32 %v28, 0.0
  %v30 = vstv %s20
  %v31 = vsub.s32 %v19, %v30
  %32 = vset.pattern.permute.xlu0 0
  %33 = vperm.xlu0 %32, %v31
  %v34 = vpop.permute.xlu0 %33
  %vm35 = vcmp.eq.s32.totalorder %v22, %v34
  %v36 = vsel %vm35, %v23, 0.0
  %v37 = vadd.f32 %v36, 0.0
  %v38 = vld [vmem:[#allocation3] sm:$0xff]
  %v39 = vsub.f32 %v24, %v25
  %v40 = vmul.f32 %v39, 1.442695
  %v41 = vpow.pop %v40
  %v42 = vmul.f32 %v38, %v41
  %v43 = vadd.f32 %v42, %v29
  %vm44 = vcmask 261120
  %45 = vst.msk [vmem:[#allocation3] sm:$0xff] %vm44, %v43
  %v46 = vld [vmem:[#allocation4] sm:$0xff]
  %v47 = vadd.f32 %v46, %v37
  %48 = vst.msk [vmem:[#allocation4] sm:$0xff] %vm44, %v47
  %49 = vst.msk [vmem:[#allocation2] sm:$0xff] %vm44, %v25
  // Predicated region
  $region14: #{cross_entropy_loss.1} parent=0 // pred_check
    %p50 = pneg %p11
  $region15: #{cross_entropy_loss.1} parent=0 // pred_check_branch
    %52 = sbr.rel (%p50) target = $region17
  $region16: #{cross_entropy_loss.1} parent=0 // pred_region
    %v53 = vld [vmem:[#allocation2] sm:$0xff]
    %v54 = vsel %vm44, %v53, -inf
    %55 = vmax.xlane.f32.xlu0 %v54
    %v56 = vpop.xlane.xlu0 %55
    %v57 = vld [vmem:[#allocation3] sm:$0xff]
    %v58 = vsub.f32 %v53, %v56
    %v59 = vmul.f32 %v58, 1.442695
    %v60 = vpow.pop %v59
    %v61 = vmul.f32 %v57, %v60
    %v62 = vsel %vm44, %v61, 0.0
    %63 = vadd.xlane.f32.xlu0 %v62
    %v64 = vpop.xlane.xlu0 %63
    %v65 = vld [vmem:[#allocation4] sm:$0xff]
    %v66 = vsel %vm44, %v65, 0.0
    %67 = vadd.xlane.f32.xlu0 %v66
    %v68 = vpop.xlane.xlu0 %67
    %v69 = vlog2.pop %v64
    %v70 = vmul.f32 %v69, 0.6931472
    %v71 = vadd.f32 %v56, %v70
    %v72 = vsub.f32 %v71, %v68
    %vm73 = vcmask 7168
    %74 = vst.msk [vmem:[%s2] sm:$0xff] %vm73, %v72
  $region17: #{cross_entropy_loss.1} parent=0 // pred_fallthru
    _
  // Predicated region
  $region18: #{cross_entropy_loss.1} parent=0 // pred_check
    _
  $region19: #{cross_entropy_loss.1} parent=0 // pred_check_branch
    %76 = sbr.rel (0) target = $region21
  $region20: #{cross_entropy_loss.1} parent=0 // pred_region
    _
  $region21: #{cross_entropy_loss.1} parent=0 // pred_fallthru
    _
  // Predicated region
  $region22: #{cross_entropy_loss.1} parent=0 // pred_check
    _
  $region23: #{cross_entropy_loss.1} parent=0 // pred_check_branch
    %78 = sbr.rel (0) target = $region25
  $region24: #{cross_entropy_loss.1} parent=0 // pred_region
    _
  $region25: #{cross_entropy_loss.1} parent=0 // pred_fallthru
    _

</llo_original>
